<compile_context>
chip_gen: v6e
topology: v6e:2x2x1
jax: 0.10.0
libtpu: 0.0.40
codegen_flags: <defaults>
</compile_context>

<pallas_src>
import functools
import math

import jax
import jax.numpy as jnp
from jax.experimental import pallas as pl
from jax.experimental.pallas import tpu as pltpu


def _make_norm_kernel(eps: float, feat: int):
    """LayerNormalization over a (block_rows, feat) tile.

    Matches torch semantics: mean over last dim, unbiased std (ddof=1),
    eps added to *std* (not variance), scalar learnable alpha / bias.
    """
    inv_n = 1.0 / feat
    inv_nm1 = 1.0 / max(feat - 1, 1)   # feat==1: torch would NaN; we emit beta

    def kernel(params_ref, x_ref, o_ref):
        alpha = params_ref[0]
        beta = params_ref[1]

        x = x_ref[...].astype(jnp.float32)

        # One-pass moments: the two lane reductions issue back-to-back on the XLU.
        sum_x = jnp.sum(x, axis=-1, keepdims=True)
        sum_xx = jnp.sum(x * x, axis=-1, keepdims=True)
        mean = sum_x * inv_n
        # Unbiased variance (torch.Tensor.std default, ddof=1).
        var = (sum_xx - sum_x * mean) * inv_nm1
        var = jnp.maximum(var, 0.0)          # guard tiny negatives from cancellation
        std = jnp.sqrt(var)

        inv = alpha / (std + eps)            # eps added to std (torch semantics)
        o_ref[...] = ((x - mean) * inv + beta).astype(o_ref.dtype)

    return kernel


def _vmem_capacity_bytes() -> int:
    """Per-TensorCore VMEM capacity; conservative fallback if unqueryable."""
    try:
        cap = getattr(pltpu.get_tpu_info(), "vmem_capacity_bytes", None)
        if cap:
            return int(cap)
    except Exception:
        pass
    return 64 << 20                          # v7x per-TC VMEM (smallest current gen)


@functools.partial(jax.jit, static_argnames=("eps", "block_rows"))
def encoder_forward(x, mask=None, *, alpha, beta, eps=1e-6, block_rows=1024):
    """Encoder forward with an empty layer stack: the final LayerNormalization."""
    del mask  # consumed only by the abstract encoder layers
    orig_shape = x.shape
    feat = orig_shape[-1]
    rows = math.prod(orig_shape[:-1])
    x2 = x.reshape(rows, feat)

    itemsize = jnp.dtype(x.dtype).itemsize
    pack = {1: 32, 2: 16}.get(itemsize, 8)   # sublane pack per dtype

    # Generation-aware VMEM budgeting: leave headroom for compiler scratch and
    # bound the in+out double-buffered tile footprint (4 copies of one tile).
    vmem_phys = _vmem_capacity_bytes()
    vmem_limit = max(32 << 20, min(vmem_phys - (16 << 20), 128 << 20))
    tile_budget = min(48 << 20, (vmem_limit * 3) // 4)
    row_bytes = feat * itemsize
    max_br = max(pack, (tile_budget // (4 * row_bytes)) // pack * pack)

    br = max(pack, (min(block_rows, max_br) // pack) * pack)
    br = min(br, pl.cdiv(rows, pack) * pack)
    # Keep >= 2 grid steps when possible so the "parallel" row axis can shard
    # across both TensorCores on v7x (never collapse to one giant tile).
    if br >= rows and rows > pack:
        br = max(pack, pl.cdiv(pl.cdiv(rows, 2), pack) * pack)
    grid_rows = pl.cdiv(rows, br)            # edge block is masked by Pallas

    params = jnp.stack([jnp.asarray(alpha, jnp.float32).reshape(()),
                        jnp.asarray(beta, jnp.float32).reshape(())])

    out2 = pl.pallas_call(
        _make_norm_kernel(eps, feat),
        out_shape=jax.ShapeDtypeStruct((rows, feat), x.dtype),
        grid=(grid_rows,),
        in_specs=[
            pl.BlockSpec(memory_space=pltpu.MemorySpace.SMEM),   # [alpha, beta]
            pl.BlockSpec((br, feat), lambda i: (i, 0)),          # row tile, full width
        ],
        out_specs=pl.BlockSpec((br, feat), lambda i: (i, 0)),
        compiler_params=pltpu.CompilerParams(
            dimension_semantics=("parallel",),                   # megacore on v7x
            vmem_limit_bytes=int(vmem_limit),
        ),
    )(params, x2)

    return out2.reshape(orig_shape)


if __name__ == "__main__":
    key = jax.random.PRNGKey(0)
    k1, k2 = jax.random.split(key)

    # LayerNormalization init values: alpha = ones(1), bias = zeros(1)
    alpha = jnp.float32(1.0)
    beta = jnp.float32(0.0)

    def reference(x, alpha, beta, eps=1e-6):
        mean = jnp.mean(x, axis=-1, keepdims=True)
        std = jnp.std(x, axis=-1, keepdims=True, ddof=1)   # torch unbiased std
        return alpha * (x - mean) / (std + eps) + beta

    # Case 1: Encoder-shaped input (batch=2, seq=8, hidden=32);
    #         feature dim < 128 exercises the full-extent (non-128-aligned) block.
    x1 = jax.random.normal(k1, (2, 8, 32), dtype=jnp.float32)
    mask1 = jnp.ones((2, 1, 8, 8), dtype=jnp.float32)      # unused by the norm
    out1 = jax.block_until_ready(encoder_forward(x1, mask1, alpha=alpha, beta=beta))
    ref1 = reference(x1, alpha, beta)
    assert out1.shape == x1.shape
    assert jnp.allclose(out1, ref1, atol=1e-4, rtol=1e-4), "mismatch vs reference (case 1)"

    # Case 2: rows (300) not a multiple of the row tile -> exercises the masked
    #         edge block of the pl.cdiv grid (no wrapper padding / slicing).
    x2 = jax.random.normal(k2, (3, 100, 128), dtype=jnp.float32)
    out2 = jax.block_until_ready(encoder_forward(x2, None, alpha=alpha, beta=beta))
    ref2 = reference(x2, alpha, beta)
    assert jnp.allclose(out2, ref2, atol=1e-4, rtol=1e-4), "mismatch vs reference (case 2)"

    print("KERNEL_OK")
</pallas_src>

<mosaic_0001>
module attributes {stable_mosaic.version = 11 : i64} {
  func.func @kernel(%arg0: i32, %arg1: memref<2xf32, #tpu.memory_space<smem>>, %arg2: memref<8x32xf32, #tpu.memory_space<vmem>>, %arg3: memref<8x32xf32, #tpu.memory_space<vmem>>) attributes {dimension_semantics = [#tpu.dimension_semantics<parallel>], iteration_bounds = array<i64: 2>, scalar_prefetch = 0 : i64, scratch_operands = 0 : i64, tpu.core_type = #tpu.core_type<tc>, window_params = [{transform_indices = @transform_0, window_bounds = array<i64: 2>}, {transform_indices = @transform_1, window_bounds = array<i64: 8, 32>}, {transform_indices = @transform_2, window_bounds = array<i64: 8, 32>}]} {
    %c0 = arith.constant 0 : index
    %0 = memref.load %arg1[%c0] : memref<2xf32, #tpu.memory_space<smem>>
    %c1 = arith.constant 1 : index
    %1 = memref.load %arg1[%c1] : memref<2xf32, #tpu.memory_space<smem>>
    %c0_0 = arith.constant 0 : index
    %c0_1 = arith.constant 0 : index
    %2 = vector.load %arg2[%c0_0, %c0_1] : memref<8x32xf32, #tpu.memory_space<vmem>>, vector<8x32xf32>
    %cst = arith.constant dense<0.000000e+00> : vector<8xf32>
    %3 = vector.multi_reduction <add>, %2, %cst [1] : vector<8x32xf32> to vector<8xf32>
    %4 = vector.shape_cast %3 : vector<8xf32> to vector<8x1xf32>
    %5 = arith.mulf %2, %2 : vector<8x32xf32>
    %cst_2 = arith.constant dense<0.000000e+00> : vector<8xf32>
    %6 = vector.multi_reduction <add>, %5, %cst_2 [1] : vector<8x32xf32> to vector<8xf32>
    %7 = vector.shape_cast %6 : vector<8xf32> to vector<8x1xf32>
    %cst_3 = arith.constant 3.125000e-02 : f32
    %8 = vector.broadcast %cst_3 : f32 to vector<8x1xf32>
    %9 = arith.mulf %4, %8 : vector<8x1xf32>
    %10 = arith.mulf %4, %9 : vector<8x1xf32>
    %11 = arith.subf %7, %10 : vector<8x1xf32>
    %cst_4 = arith.constant 0.0322580636 : f32
    %12 = vector.broadcast %cst_4 : f32 to vector<8x1xf32>
    %13 = arith.mulf %11, %12 : vector<8x1xf32>
    %cst_5 = arith.constant 0.000000e+00 : f32
    %14 = vector.broadcast %cst_5 : f32 to vector<8x1xf32>
    %15 = arith.maximumf %13, %14 : vector<8x1xf32>
    %16 = math.sqrt %15 : vector<8x1xf32>
    %cst_6 = arith.constant 9.99999997E-7 : f32
    %17 = vector.broadcast %cst_6 : f32 to vector<8x1xf32>
    %18 = arith.addf %16, %17 : vector<8x1xf32>
    %19 = vector.broadcast %0 : f32 to vector<8x1xf32>
    %20 = arith.divf %19, %18 : vector<8x1xf32>
    %21 = vector.broadcast %9 : vector<8x1xf32> to vector<8x32xf32>
    %22 = arith.subf %2, %21 : vector<8x32xf32>
    %23 = vector.broadcast %20 : vector<8x1xf32> to vector<8x32xf32>
    %24 = arith.mulf %22, %23 : vector<8x32xf32>
    %25 = vector.broadcast %1 : f32 to vector<8x32xf32>
    %26 = arith.addf %24, %25 : vector<8x32xf32>
    %c0_7 = arith.constant 0 : index
    %c0_8 = arith.constant 0 : index
    %27 = vector.load %arg3[%c0_7, %c0_8] : memref<8x32xf32, #tpu.memory_space<vmem>>, vector<8x32xf32>
    tpu.vector_store %arg3[%c0_7, %c0_8], %26 {strides = array<i32>} : memref<8x32xf32, #tpu.memory_space<vmem>>, vector<8x32xf32>,
    return
  }
  func.func @transform_0(%arg0: i32) -> i32 {
    %c0_i32 = arith.constant 0 : i32
    %c0_i32_0 = arith.constant 0 : i32
    return %c0_i32 : i32
  }
  func.func @transform_1(%arg0: i32) -> (i32, i32) {
    %c0_i32 = arith.constant 0 : i32
    %c0_i32_0 = arith.constant 0 : i32
    return %arg0, %c0_i32 : i32, i32
  }
  func.func @transform_2(%arg0: i32) -> (i32, i32) {
    %c0_i32 = arith.constant 0 : i32
    %c0_i32_0 = arith.constant 0 : i32
    return %arg0, %c0_i32 : i32, i32
  }
}

</mosaic_0001>

<llo_original>
// kernel: encoder_forward.1
$region0: #{encoder_forward.1}
  #allocation0 [shape = 'u32[]', space=smem, size = 0x4, offset = 0x4, fixed_abs, tag = 'smem constant byte address 0x4 - core index']
  #allocation1 [shape = 'u32[144,128]{1,0:T(1,128)}', space=vmem, size = 0x12000, scoped, tag = 'internal scratch']
  %s0 = inlined_call_operand.vmem [shape: f32[2], index: 0, kind: input, shape index: {}]
  %s1 = inlined_call_operand.hbm [shape: f32[16,32], index: 1, kind: input, shape index: {}]
  %s2 = inlined_call_operand.hbm [shape: f32[16,32], index: 2, kind: output, shape index: {}]
  %s3 = sld [smem:[#allocation0]]
  $region49: #{encoder_forward.1} parent=0
    _
  %s5 = ssub.s32 1, %s3
  %s6 = scalar_select 0, %s5, %s3
  $region1: #{encoder_forward.1} parent=0
    #allocation2 [shape = 'u8[512]{0}', space=smem, size = 0x200, scoped, tag = 'input window, operand 0, single buffered']
    #allocation3 [shape = 's32[2]{0}', space=sflag, size = 0x8, scoped, tag = 'scoped memory for encoder_forward.1']
    #allocation4 [shape = 's32[2]{0}', space=sflag, size = 0x8, scoped, tag = 'scoped memory for encoder_forward.1']
    #allocation5 [shape = 's32[2]{0}', space=sflag, size = 0x8, scoped, tag = 'scoped memory for encoder_forward.1']
    #allocation6 [shape = 'u8[8192]{0}', space=vmem, size = 0x2000, scoped, tag = 'input window, operand 1']
    #allocation7 [shape = 'u8[8192]{0}', space=vmem, size = 0x2000, scoped, tag = 'output window, operand 0']
    %7 = vsyncpa [#allocation5], 0
    %8 = vsyncpa [#allocation3], 0
    %s9 = scalar_lea.sflag [#allocation3], 1
    %10 = vsyncpa %s9, 0
    %11 = vsyncpa [#allocation4], 0
    %s12 = scalar_lea.sflag [#allocation4], 1
    %13 = vsyncpa %s12, 0
    loop: start=0, step=1, limit=4
    $region2: #{encoder_forward.1} parent=1 // loop_pre_header
      _
    $region3: #{encoder_forward.1} parent=1 // loop_header
      %s15 = sphi 0, %s19
      %p16 = scmp.ge.s32.totalorder %s15, 4
      %s23 = sphi 0, %s23
      %s25 = sphi 0, %s23
      %s26 = sphi 0, %s25
      %s40 = sphi 0, %s26
      %s46 = sphi 0, %s48
      %s49 = sphi 0, %s46
      %s50 = sphi 0, %s49
      %s66 = sphi 0, %s50
      %s72 = sphi 0, %s74
      %s75 = sphi 0, %s72
      %s76 = sphi 0, %s75
      %s92 = sphi 0, %s76
    $region4: #{encoder_forward.1} parent=1 // loop_header_branch
      %18 = sbr.rel (%p16) target = $region8
    $region5: #{encoder_forward.1} parent=1 // loop_body
      %s20 = ssub.s32 %s15, 1
      %s21 = ssub.s32 %s15, 2
      %s22 = sadd.s32 %s15, 1
      %s24 = sadd.s32 %s23, 1
      %p27 = scmp.eq.s32.totalorder %s15, 1
      %p28 = scmp.ne.s32.totalorder %s23, %s25
      %p29 = scmp.eq.s32.totalorder %s15, 0
      %p30 = por %p28, %p29
      %p31 = scmp.ne.s32.totalorder %s23, %s25
      %p32 = scmp.eq.s32.totalorder %s20, 1
      %p33 = por %p31, %p32
      %p34 = scmp.ne.s32.totalorder %s25, %s26
      %p35 = scmp.eq.s32.totalorder %s20, 0
      %p36 = por %p34, %p35
      %p37 = scmp.ne.s32.totalorder %s25, %s26
      %p38 = scmp.eq.s32.totalorder %s21, 1
      %p39 = por %p37, %p38
      %p41 = scmp.ne.s32.totalorder %s26, %s40
      %p42 = scmp.eq.s32.totalorder %s21, 0
      %p43 = por %p41, %p42
      %s44 = ssub.s32 %s15, %s22
      %p45 = scmp.eq.s32.totalorder %s44, 0
      %s47 = sadd.s32 %s46, 1
      %s48 = scalar_select %p45, %s46, %s47
      %p51 = pneg %p45
      %p52 = scmp.eq.s32.totalorder %s15, 1
      %p53 = por %p51, %p52
      %p54 = scmp.ne.s32.totalorder %s46, %s49
      %p55 = scmp.eq.s32.totalorder %s15, 0
      %p56 = por %p54, %p55
      %p57 = scmp.ne.s32.totalorder %s46, %s49
      %p58 = scmp.eq.s32.totalorder %s20, 1
      %p59 = por %p57, %p58
      %p60 = scmp.ne.s32.totalorder %s49, %s50
      %p61 = scmp.eq.s32.totalorder %s20, 0
      %p62 = por %p60, %p61
      %p63 = scmp.ne.s32.totalorder %s49, %s50
      %p64 = scmp.eq.s32.totalorder %s21, 1
      %p65 = por %p63, %p64
      %p67 = scmp.ne.s32.totalorder %s50, %s66
      %p68 = scmp.eq.s32.totalorder %s21, 0
      %p69 = por %p67, %p68
      %s70 = ssub.s32 %s15, %s22
      %p71 = scmp.eq.s32.totalorder %s70, 0
      %s73 = sadd.s32 %s72, 1
      %s74 = scalar_select %p71, %s72, %s73
      %p77 = pneg %p71
      %p78 = scmp.eq.s32.totalorder %s15, 1
      %p79 = por %p77, %p78
      %p80 = scmp.ne.s32.totalorder %s72, %s75
      %p81 = scmp.eq.s32.totalorder %s15, 0
      %p82 = por %p80, %p81
      %p83 = scmp.ne.s32.totalorder %s72, %s75
      %p84 = scmp.eq.s32.totalorder %s20, 1
      %p85 = por %p83, %p84
      %p86 = scmp.ne.s32.totalorder %s75, %s76
      %p87 = scmp.eq.s32.totalorder %s20, 0
      %p88 = por %p86, %p87
      %p89 = scmp.ne.s32.totalorder %s75, %s76
      %p90 = scmp.eq.s32.totalorder %s21, 1
      %p91 = por %p89, %p90
      %p93 = scmp.ne.s32.totalorder %s76, %s92
      %p94 = scmp.eq.s32.totalorder %s21, 0
      %p95 = por %p93, %p94
      %p96 = scmp.le.s32.totalorder 1, %s15
      %p97 = scmp.lt.s32.totalorder %s15, 3
      %p98 = pnand %p96, %p97
      %p99 = pneg %p98
      // Predicated region
      $region9: #{encoder_forward.1} parent=5 // pred_check
        _
      $region10: #{encoder_forward.1} parent=5 // pred_check_branch
        %101 = sbr.rel (%p98) target = $region12
      $region11: #{encoder_forward.1} parent=5 // pred_region
        %s102 = ssub.s32 %s15, 1
        // Predicated region
        $region13: #{encoder_forward.1} parent=11 // pred_check
          %p103 = pneg %p36
        $region14: #{encoder_forward.1} parent=11 // pred_check_branch
          %105 = sbr.rel (%p103) target = $region16
        $region15: #{encoder_forward.1} parent=11 // pred_region
          %s107 = ssub.s32 16, 16
          %108 = vsyncadd [#allocation5], %s107
          %s110 = sshll.u32 %s0, 4
          %s111 = int_to_ptr.vmem [resolvable:$true] %s110
          %113 = dma.vmem_to_smem %s111, 16, [#allocation2], [#allocation5]
        $region16: #{encoder_forward.1} parent=11 // pred_fallthru
          _
      $region12: #{encoder_forward.1} parent=5 // pred_fallthru
        _
      %p114 = scmp.lt.s32.totalorder %s15, 2
      // Predicated region
      $region17: #{encoder_forward.1} parent=5 // pred_check
        %p115 = pneg %p114
      $region18: #{encoder_forward.1} parent=5 // pred_check_branch
        %117 = sbr.rel (%p115) target = $region20
      $region19: #{encoder_forward.1} parent=5 // pred_region
        // Predicated region
        $region21: #{encoder_forward.1} parent=19 // pred_check
          %p118 = pneg %p56
        $region22: #{encoder_forward.1} parent=19 // pred_check_branch
          %120 = sbr.rel (%p118) target = $region24
        $region23: #{encoder_forward.1} parent=19 // pred_region
          %s121 = sand.u32 %s46, 1
          %s122 = scalar_lea.sflag [#allocation3], %s121
          %s123 = sand.u32 %s46, 1
          %s124 = smul.addr %s123, 8
          %s125 = scalar_lea.vmem [#allocation6], %s124
          %s127 = ssub.s32 128, 128
          %128 = vsyncadd %s122, %s127
          %s129 = smul.addr %s15, 128
          %s130 = scalar_lea.hbm %s1, %s129
          %s132 = sshll.u32 %s125, 4
          %s133 = int_to_ptr.vmem [resolvable:$true] %s132
          %135 = dma.hbm_to_vmem [thread:$0]  %s130, 128, %s133, %s122
        $region24: #{encoder_forward.1} parent=19 // pred_fallthru
          _
      $region20: #{encoder_forward.1} parent=5 // pred_fallthru
        _
      %p136 = scmp.le.s32.totalorder 1, %s15
      %p137 = scmp.lt.s32.totalorder %s15, 3
      %p138 = pnand %p136, %p137
      %p139 = pneg %p138
      // Predicated region
      $region25: #{encoder_forward.1} parent=5 // pred_check
        _
      $region26: #{encoder_forward.1} parent=5 // pred_check_branch
        %141 = sbr.rel (%p138) target = $region28
      $region27: #{encoder_forward.1} parent=5 // pred_region
        %s142 = ssub.s32 %s15, 1
        // Predicated region
        $region29: #{encoder_forward.1} parent=27 // pred_check
          %p143 = pneg %p36
        $region30: #{encoder_forward.1} parent=27 // pred_check_branch
          %145 = sbr.rel (%p143) target = $region32
        $region31: #{encoder_forward.1} parent=27 // pred_region
          %146 = dma.done [#allocation5], 16
        $region32: #{encoder_forward.1} parent=27 // pred_fallthru
          _
        %s147 = sand.u32 %s49, 1
        %s148 = scalar_lea.sflag [#allocation3], %s147
        %s149 = sand.u32 %s49, 1
        %s150 = smul.addr %s149, 8
        %s151 = scalar_lea.vmem [#allocation6], %s150
        // Predicated region
        $region33: #{encoder_forward.1} parent=27 // pred_check
          %p152 = pneg %p62
        $region34: #{encoder_forward.1} parent=27 // pred_check_branch
          %154 = sbr.rel (%p152) target = $region36
        $region35: #{encoder_forward.1} parent=27 // pred_region
          %155 = dma.done %s148, 128
        $region36: #{encoder_forward.1} parent=27 // pred_fallthru
          _
        %156 = sfence
        %p157 = pneg %p36
        %p158 = pneg %p33
        %s159 = sand.u32 %s49, 1
        %s160 = scalar_lea.sflag [#allocation3], %s159
        %s161 = sand.u32 %s49, 1
        %s162 = smul.addr %s161, 8
        %s163 = scalar_lea.vmem [#allocation6], %s162
        %p164 = pneg %p62
        %p165 = pneg %p59
        %p166 = pneg %p88
        %p167 = pneg %p85
        %s168 = sand.u32 %s75, 1
        %s169 = scalar_lea.sflag [#allocation4], %s168
        %s170 = sand.u32 %s75, 1
        %s171 = smul.addr %s170, 8
        %s172 = scalar_lea.vmem [#allocation7], %s171
        %s173 = sld [smem:[#allocation2]]
        %s174 = sld [smem:[#allocation2 + $0x1]]
        %v175 = vld [vmem:[%s151] sm:$0xff]
        %vm176 = vcmask 261120
        %v177 = vsel %vm176, %v175, 0.0
        %178 = vadd.xlane.f32.xlu0 %v177
        %v179 = vpop.xlane.xlu0 %178
        %v180 = vmul.f32 %v175, %v175
        %v181 = vsel %vm176, %v180, 0.0
        %182 = vadd.xlane.f32.xlu0 %v181
        %v183 = vpop.xlane.xlu0 %182
        %v184 = vmul.f32 %v179, 0.03125
        %v185 = vmul.f32 %v179, %v184
        %v186 = vsub.f32 %v183, %v185
        %v187 = vmul.f32 %v186, 0.032258064
        %v188 = vmax.f32 %v187, 0.0
        %v189 = vrsqrt.pop %v188
        %v190 = vmul.f32 %v188, %v189
        %vm191 = vcmp.eq.f32.partialorder %v188, inf
        %v192 = vsel %vm191, %v188, %v190
        %vm193 = vcmp.eq.f32.partialorder %v188, 0.0
        %v194 = vand.u32 %v188, 2147483648
        %v195 = vsel %vm193, %v194, %v192
        %v196 = vadd.f32 %v195, 1e-06
        %v197 = vstv %s173
        %v198 = vrcp.pop %v196
        %v199 = vmul.f32 %v197, %v198
        %v200 = vsub.f32 %v175, %v184
        %v201 = vmul.f32 %v200, %v199
        %v202 = vstv %s174
        %v203 = vadd.f32 %v201, %v202
        %204 = vst.msk [vmem:[%s172] sm:$0xff] %vm176, %v203
        %s205 = sand.u32 %s75, 1
        %s206 = scalar_lea.sflag [#allocation4], %s205
        %s207 = sand.u32 %s75, 1
        %s208 = smul.addr %s207, 8
        %s209 = scalar_lea.vmem [#allocation7], %s208
        // Predicated region
        $region37: #{encoder_forward.1} parent=27 // pred_check
          %p210 = pneg %p85
        $region38: #{encoder_forward.1} parent=27 // pred_check_branch
          %212 = sbr.rel (%p210) target = $region40
        $region39: #{encoder_forward.1} parent=27 // pred_region
          %s214 = ssub.s32 128, 128
          %215 = vsyncadd %s206, %s214
          %s216 = smul.addr %s20, 128
          %s217 = scalar_lea.hbm %s2, %s216
          %s219 = sshll.u32 %s209, 4
          %s220 = int_to_ptr.vmem [resolvable:$true] %s219
          %222 = dma.vmem_to_hbm [thread:$0]  %s220, 128, %s217, %s206
        $region40: #{encoder_forward.1} parent=27 // pred_fallthru
          _
      $region28: #{encoder_forward.1} parent=5 // pred_fallthru
        _
      %p223 = scmp.le.s32.totalorder 2, %s15
      // Predicated region
      $region41: #{encoder_forward.1} parent=5 // pred_check
        %p224 = pneg %p223
      $region42: #{encoder_forward.1} parent=5 // pred_check_branch
        %226 = sbr.rel (%p224) target = $region44
      $region43: #{encoder_forward.1} parent=5 // pred_region
        %s227 = ssub.s32 %s15, 2
        // Predicated region
        $region45: #{encoder_forward.1} parent=43 // pred_check
          %p228 = pneg %p91
        $region46: #{encoder_forward.1} parent=43 // pred_check_branch
          %230 = sbr.rel (%p228) target = $region48
        $region47: #{encoder_forward.1} parent=43 // pred_region
          %s231 = sand.u32 %s76, 1
          %s232 = scalar_lea.sflag [#allocation4], %s231
          %s233 = sand.u32 %s76, 1
          %s234 = smul.addr %s233, 8
          %s235 = scalar_lea.vmem [#allocation7], %s234
          %236 = dma.done %s232, 128
        $region48: #{encoder_forward.1} parent=43 // pred_fallthru
          _
      $region44: #{encoder_forward.1} parent=5 // pred_fallthru
        _
    $region6: #{encoder_forward.1} parent=1 // loop_footer
      %s19 = sadd.s32 1, %s15
    $region7: #{encoder_forward.1} parent=1 // loop_footer_branch
      %14 = sbr.rel target = $region3
    $region8: #{encoder_forward.1} parent=1 // loop_exit
      _
    %237 = vsyncpa [#allocation3], 1
    %s238 = scalar_lea.sflag [#allocation3], 1
    %239 = vsyncpa %s238, 1
    %240 = vsyncpa [#allocation4], 1
    %s241 = scalar_lea.sflag [#allocation4], 1
    %242 = vsyncpa %s241, 1
    %243 = vsyncpa [#allocation5], 1
    %s244 = scalar_lea.sflag [#allocation5], 1
    %245 = vsyncpa %s244, 1

</llo_original>
